<compile_context>
chip_gen: v5e
topology: v5e:2x2
jax: 0.10.0
libtpu: 0.0.40
codegen_flags: <defaults>
</compile_context>

<pallas_src>
import functools

import numpy as np
import jax
import jax.numpy as jnp
from jax import lax
from jax.experimental import pallas as pl
from jax.experimental.pallas import tpu as pltpu


# ----------------------------- simplex projection ---------------------------

def _simplex_project(z, n_bisect=26):
    """Row-wise Euclidean projection onto the probability simplex.

    Same result as KDS.activate() (sort + cumsum + gather), computed sort-free:
    the projection is relu(z - w) where the per-row scalar threshold w solves
        f(w) = sum_j relu(z_j - w) = 1.
    f is piecewise-linear, convex and strictly decreasing wherever f > 0, and
    f(max(z) - 1) >= 1 >= 0 = f(max(z)), so the root is bracketed by an
    interval of width 1.  We bisect n_bisect times (O(rows*H) VPU work + one
    lane reduction per step -- no (rows,H,H) temporaries), then take one exact
    Newton step  w = (sum_{z_j > w} z_j - 1) / count,  which reproduces the
    sorted reference's threshold (ties at the boundary do not change it).
    """
    hi = jnp.max(z, axis=-1, keepdims=True)            # f(hi) = 0 <= 1
    lo = hi - 1.0                                       # f(lo) >= 1

    def body(_, carry):
        lo, hi = carry
        mid = 0.5 * (lo + hi)
        f = jnp.sum(jnp.maximum(z - mid, 0.0), axis=-1, keepdims=True)
        ge = f >= 1.0
        return jnp.where(ge, mid, lo), jnp.where(ge, hi, mid)

    lo, hi = lax.fori_loop(0, n_bisect, body, (lo, hi))
    w = 0.5 * (lo + hi)

    # Exact finalization (one Newton step on the piecewise-linear f).
    active = z > w                                                       # bool
    count = jnp.maximum(
        jnp.sum(active.astype(jnp.float32), axis=-1, keepdims=True), 1.0)
    s = jnp.sum(jnp.where(active, z, 0.0), axis=-1, keepdims=True)
    w = (s - 1.0) / count
    return jnp.maximum(z - w, 0.0)


# ---------------------------------- kernel ----------------------------------

def _kds_kernel(scal_ref, y_ref, w_ref, n_ref, cw_ref, out_ref, *,
                num_layers, n_bisect, mxu_dtype):
    y = y_ref[...].astype(jnp.float32)              # (TB, D)
    W = w_ref[...]                                  # (H, D)  mxu_dtype
    N = n_ref[...]                                  # (H, H)  mxu_dtype = -step*W@W.T
    cw = cw_ref[...].astype(jnp.float32)            # (1, H)  = -step*penalty*|w_h|^2
    coef = scal_ref[0]                              # step*(1 + 2*penalty)
    sp = scal_ref[1]                                # step*penalty

    tb = y.shape[0]
    h = N.shape[0]

    # yWt[b,h] = sum_d y[b,d]*W[h,d]  (contract last axes -> no W.T materialized)
    yWt = lax.dot_general(y.astype(mxu_dtype), W,
                          dimension_numbers=(((1,), (1,)), ((), ())),
                          preferred_element_type=jnp.float32)            # (TB, H)
    y_sq = jnp.sum(y * y, axis=-1, keepdims=True)                        # (TB, 1)

    # Per-layer pre-activation is  x + x@N + c  with all step/penalty constants
    # folded in once per tile:
    #   x - step*((x@W - y)@W.T + penalty*weight)
    #     = x + x@(-step*G) + step*(1+2p)*yWt - step*p*|y|^2 - step*p*|w_h|^2
    c = coef * yWt - sp * y_sq + cw                                      # (TB, H)

    x0 = jnp.zeros((tb, h), jnp.float32)

    def fista_body(layer, carry):
        x_tmp, x_old = carry
        xN = jnp.dot(x_tmp.astype(mxu_dtype), N,
                     preferred_element_type=jnp.float32)                 # (TB, H)
        x_new = _simplex_project(x_tmp + xN + c, n_bisect)
        lf = layer.astype(jnp.float32)
        x_next = x_new + (lf / (lf + 3.0)) * (x_new - x_old)
        return x_next, x_new

    # fori_loop (not an unrolled Python for) bounds per-layer live ranges.
    _, x_final = lax.fori_loop(0, num_layers, fista_body, (x0, x0))

    # decode: x @ W
    out_ref[...] = jnp.dot(x_final.astype(mxu_dtype), W,
                           preferred_element_type=jnp.float32).astype(out_ref.dtype)


# --------------------------------- wrapper ----------------------------------

def _device_kind():
    try:
        return jax.devices()[0].device_kind.lower()
    except Exception:
        return ""


def _is_v7(kind):
    return ("v7" in kind) or ("7x" in kind)


def _pick_tile_b(B, D, H, mxu_itemsize, device_kind):
    """Batch tile: largest that fits the VMEM budget, multiple of 16 preferred.

    v7x (64 MiB physical / TC): tighter budget and >= 2 grid steps so the
    batch-parallel grid feeds both TensorCores.  v5e/v6e (128 MiB, 1 TC):
    the single largest tile wins (per-step overhead ~0.35 us, smaller blocks
    lose roofline), so no multi-step requirement.
    """
    is_v7 = _is_v7(device_kind)
    budget = (24 if is_v7 else 56) * 1024 * 1024
    # Resident constants W(H,D), N(H,H), cw(1,H) (double-buffered by default).
    resident = 2 * (mxu_itemsize * (H * D + H * H) + 4 * H)
    avail = max(budget - resident, 1 * 1024 * 1024)
    # Per batch-row: ~8 live (H,) f32 vectors in the FISTA loop
    # + double-buffered y/out (D,) blocks.
    per_row = 4 * (8 * H + 4 * D)
    cap = max(16, avail // per_row)

    divisors = [t for t in range(min(B, cap), 0, -1) if B % t == 0]
    if not divisors:
        return B
    multi_step_possible = any(B // t >= 2 for t in divisors)
    best = None
    for t in divisors:                       # descending: biggest tile first
        if is_v7 and B // t < 2 and multi_step_possible:
            continue                         # keep >=2 steps on v7x (2 TCs)
        if t % 16 == 0:                      # bf16 packs 16 sublanes per vreg
            return t
        if best is None:
            best = t
    return best if best is not None else B


def kds_forward(y, W, step, *, num_layers, penalty, tile_b=None,
                mxu_dtype=jnp.bfloat16, n_bisect=26):
    """Pallas TPU implementation of KDS.forward (accelerate=True).

    bf16 MXU operands with f32 accumulation is the fast path on v5e/v6e/v7x;
    all projection / VPU arithmetic stays f32.  mxu_dtype=jnp.float32 keeps a
    near-exact path.
    """
    B, D = y.shape
    H, D2 = W.shape
    assert D == D2
    kind = _device_kind()
    if tile_b is None:
        tile_b = _pick_tile_b(B, D, H, jnp.dtype(mxu_dtype).itemsize, kind)
    assert B % tile_b == 0

    step = jnp.asarray(step, jnp.float32)
    penalty = float(penalty)

    # Grid-invariant W/step/penalty-derived constants, hoisted out of the kernel.
    W32 = W.astype(jnp.float32)
    G = jnp.dot(W32, W32.T, preferred_element_type=jnp.float32)          # (H, H)
    N = (-step) * G                                                      # -step*W@W.T
    w_sq = jnp.sum(W32 * W32, axis=1)[None, :]                           # (1, H)
    cw = (-step * penalty) * w_sq                                        # (1, H)
    scal = jnp.stack([step * (1.0 + 2.0 * penalty),
                      step * penalty]).astype(jnp.float32)               # (2,) -> SMEM

    W_mx = W32.astype(mxu_dtype)
    # N has entries ~O(step*|G|) << 1, so the bf16 cast only perturbs the
    # gradient step, not the identity part (handled exactly in f32 in-kernel).
    N_mx = N.astype(mxu_dtype)

    kernel = functools.partial(_kds_kernel,
                               num_layers=int(num_layers),
                               n_bisect=int(n_bisect),
                               mxu_dtype=mxu_dtype)

    # TODO(synk): pad H/D to 128 (256 on v6e/v7x) for lane-dense output stores
    # and full MXU tiles, and single-buffer the constant W/N/cw blocks
    # (pipeline_mode=pl.Buffered(1)) for production shapes.
    grid_spec = pltpu.PrefetchScalarGridSpec(
        num_scalar_prefetch=1,                                           # scal -> SMEM
        grid=(B // tile_b,),
        in_specs=[
            pl.BlockSpec((tile_b, D), lambda i, scal: (i, 0)),           # y tile
            pl.BlockSpec((H, D), lambda i, scal: (0, 0)),                # W   (resident)
            pl.BlockSpec((H, H), lambda i, scal: (0, 0)),                # N   (resident)
            pl.BlockSpec((1, H), lambda i, scal: (0, 0)),                # cw  (resident)
        ],
        out_specs=pl.BlockSpec((tile_b, D), lambda i, scal: (i, 0)),
    )

    vmem_limit = (48 if _is_v7(kind) else 64) * 1024 * 1024

    return pl.pallas_call(
        kernel,
        out_shape=jax.ShapeDtypeStruct((B, D), y.dtype),
        grid_spec=grid_spec,
        compiler_params=pltpu.CompilerParams(
            dimension_semantics=("parallel",),
            vmem_limit_bytes=vmem_limit,
        ),
    )(scal, y, W_mx, N_mx, cw)


# ----------------------------- pure-JAX reference ---------------------------

def _activate_reference(x):
    m, n = x.shape
    u = -jnp.sort(-x, axis=1)
    v = (jnp.cumsum(u, axis=1) - 1.0) / (jnp.arange(n) + 1.0)
    count = jnp.sum(u > v, axis=1)
    w = jnp.take_along_axis(v, (count - 1)[:, None], axis=1)
    return jnp.maximum(x - w, 0.0)


def _kds_reference(y, W, step, num_layers, penalty):
    B = y.shape[0]
    H = W.shape[0]
    weight = (jnp.sum(y * y, axis=1, keepdims=True)
              + jnp.sum(W * W, axis=1)[None, :]
              - 2.0 * y @ W.T)
    x_tmp = jnp.zeros((B, H), jnp.float32)
    x_old = jnp.zeros((B, H), jnp.float32)
    x_new = x_tmp
    for layer in range(num_layers):
        grad = (x_tmp @ W - y) @ W.T + weight * penalty
        x_new = _activate_reference(x_tmp - grad * step)
        x_old, x_tmp = x_new, x_new + (layer / (layer + 3)) * (x_new - x_old)
    return x_new @ W


# ----------------------------------- main ------------------------------------

if __name__ == "__main__":
    # Module hyper-parameters (KDS(num_layers, input_size, hidden_size, penalty))
    num_layers = 5
    input_size = 16
    hidden_size = 32
    penalty = 0.1
    batch = 16

    key = jax.random.PRNGKey(0)
    k_y, k_w = jax.random.split(key)
    y = jax.random.normal(k_y, (batch, input_size), jnp.float32)
    # Deterministic parameter init (mirrors torch.randn(hidden_size, input_size))
    W = jax.random.normal(k_w, (hidden_size, input_size), jnp.float32)
    # step = largest singular value ** -2 (same as W.svd().S[0] ** (-2))
    step = np.linalg.svd(np.asarray(W), compute_uv=False)[0] ** (-2)

    # Targeted projection test with exact ties (flagged correctness concern):
    x_tie = jnp.array([[3.0, 3.0, 0.7, 0.7, 0.7, 0.2, 0.2, -1.0] * 4],
                      jnp.float32)
    proj = jax.block_until_ready(_simplex_project(x_tie))
    proj_ref = _activate_reference(x_tie)
    assert np.allclose(np.asarray(proj), np.asarray(proj_ref), atol=1e-6), \
        "bisection simplex projection differs from sorted reference on ties"

    ref = _kds_reference(y, W, jnp.float32(step), num_layers, penalty)

    # Near-exact path (f32 MXU operands) — tight check vs pure-JAX reference.
    out_f32 = jax.block_until_ready(
        kds_forward(y, W, step, num_layers=num_layers, penalty=penalty,
                    mxu_dtype=jnp.float32))
    assert out_f32.shape == (batch, input_size)
    assert np.allclose(np.asarray(out_f32), np.asarray(ref), rtol=1e-3, atol=1e-3), \
        "Pallas KDS (f32 MXU) output differs from pure-JAX reference"

    # Fast path (bf16 MXU operands, f32 accumulation; default on all gens).
    out_bf16 = jax.block_until_ready(
        kds_forward(y, W, step, num_layers=num_layers, penalty=penalty,
                    mxu_dtype=jnp.bfloat16))
    assert out_bf16.shape == (batch, input_size)
    assert np.allclose(np.asarray(out_bf16), np.asarray(ref), rtol=5e-2, atol=5e-2), \
        "Pallas KDS (bf16 MXU) output differs beyond bf16 tolerance"

    print("KERNEL_OK")
</pallas_src>

<mosaic_0001>
module attributes {stable_mosaic.version = 11 : i64} {
  func.func @_kds_kernel(%arg0: i32, %arg1: memref<2xf32, #tpu.memory_space<smem>>, %arg2: memref<16x16xf32, #tpu.memory_space<vmem>>, %arg3: memref<32x16xf32, #tpu.memory_space<vmem>>, %arg4: memref<32x32xf32, #tpu.memory_space<vmem>>, %arg5: memref<1x32xf32, #tpu.memory_space<vmem>>, %arg6: memref<16x16xf32, #tpu.memory_space<vmem>>) attributes {dimension_semantics = [#tpu.dimension_semantics<parallel>], iteration_bounds = array<i64: 1>, scalar_prefetch = 1 : i64, scratch_operands = 0 : i64, tpu.core_type = #tpu.core_type<tc>, window_params = [{transform_indices = @transform_0, window_bounds = array<i64: 16, 16>}, {pipeline_mode = #tpu.pipeline_mode<synchronous>, transform_indices = @transform_1, window_bounds = array<i64: 32, 16>}, {pipeline_mode = #tpu.pipeline_mode<synchronous>, transform_indices = @transform_2, window_bounds = array<i64: 32, 32>}, {pipeline_mode = #tpu.pipeline_mode<synchronous>, transform_indices = @transform_3, window_bounds = array<i64: 1, 32>}, {transform_indices = @transform_4, window_bounds = array<i64: 16, 16>}]} {
    %c0 = arith.constant 0 : index
    %c0_0 = arith.constant 0 : index
    %0 = vector.load %arg2[%c0, %c0_0] : memref<16x16xf32, #tpu.memory_space<vmem>>, vector<16x16xf32>
    %c0_1 = arith.constant 0 : index
    %c0_2 = arith.constant 0 : index
    %1 = vector.load %arg3[%c0_1, %c0_2] : memref<32x16xf32, #tpu.memory_space<vmem>>, vector<32x16xf32>
    %c0_3 = arith.constant 0 : index
    %c0_4 = arith.constant 0 : index
    %2 = vector.load %arg4[%c0_3, %c0_4] : memref<32x32xf32, #tpu.memory_space<vmem>>, vector<32x32xf32>
    %c0_5 = arith.constant 0 : index
    %c0_6 = arith.constant 0 : index
    %3 = vector.load %arg5[%c0_5, %c0_6] : memref<1x32xf32, #tpu.memory_space<vmem>>, vector<1x32xf32>
    %c0_7 = arith.constant 0 : index
    %4 = memref.load %arg1[%c0_7] : memref<2xf32, #tpu.memory_space<smem>>
    %c1 = arith.constant 1 : index
    %5 = memref.load %arg1[%c1] : memref<2xf32, #tpu.memory_space<smem>>
    %cst = arith.constant dense<0.000000e+00> : vector<16x32xf32>
    %6 = tpu.matmul %0, %1, %cst {dimension_numbers = #tpu.dot_dimension_numbers<[1], [1], [0], [0], [0, 0, 1, 0], [], []>} : vector<16x16xf32>, vector<32x16xf32>, vector<16x32xf32> -> vector<16x32xf32>
    %7 = arith.mulf %0, %0 : vector<16x16xf32>
    %cst_8 = arith.constant dense<0.000000e+00> : vector<16xf32>
    %8 = vector.multi_reduction <add>, %7, %cst_8 [1] : vector<16x16xf32> to vector<16xf32>
    %9 = vector.shape_cast %8 : vector<16xf32> to vector<16x1xf32>
    %10 = vector.broadcast %4 : f32 to vector<16x32xf32>
    %11 = arith.mulf %10, %6 : vector<16x32xf32>
    %12 = vector.broadcast %5 : f32 to vector<16x1xf32>
    %13 = arith.mulf %12, %9 : vector<16x1xf32>
    %14 = vector.broadcast %13 : vector<16x1xf32> to vector<16x32xf32>
    %15 = arith.subf %11, %14 : vector<16x32xf32>
    %16 = vector.broadcast %3 : vector<1x32xf32> to vector<16x32xf32>
    %17 = arith.addf %15, %16 : vector<16x32xf32>
    %cst_9 = arith.constant 0.000000e+00 : f32
    %18 = vector.broadcast %cst_9 : f32 to vector<16x32xf32>
    %c0_i32 = arith.constant 0 : i32
    %c5_i32 = arith.constant 5 : i32
    %19 = arith.addi %c0_i32, %c5_i32 : i32
    %c1_i32 = arith.constant 1 : i32
    %20:2 = scf.for %arg7 = %c0_i32 to %19 step %c1_i32 iter_args(%arg8 = %18, %arg9 = %18) -> (vector<16x32xf32>, vector<16x32xf32>)  : i32 {
      %cst_14 = arith.constant dense<0.000000e+00> : vector<16x32xf32>
      %23 = tpu.matmul %arg8, %2, %cst_14 {dimension_numbers = #tpu.dot_dimension_numbers<[1], [0], [0], [1], [0, 0, 1, 1], [], []>} : vector<16x32xf32>, vector<32x32xf32>, vector<16x32xf32> -> vector<16x32xf32>
      %24 = arith.addf %arg8, %23 : vector<16x32xf32>
      %25 = arith.addf %24, %17 : vector<16x32xf32>
      %cst_15 = arith.constant dense<0xFF800000> : vector<16xf32>
      %26 = vector.multi_reduction <maximumf>, %25, %cst_15 [1] : vector<16x32xf32> to vector<16xf32>
      %27 = vector.shape_cast %26 : vector<16xf32> to vector<16x1xf32>
      %cst_16 = arith.constant 1.000000e+00 : f32
      %28 = vector.broadcast %cst_16 : f32 to vector<16x1xf32>
      %29 = arith.subf %27, %28 : vector<16x1xf32>
      %c0_i32_17 = arith.constant 0 : i32
      %c26_i32 = arith.constant 26 : i32
      %30 = arith.addi %c0_i32_17, %c26_i32 : i32
      %c1_i32_18 = arith.constant 1 : i32
      %31:2 = scf.for %arg10 = %c0_i32_17 to %30 step %c1_i32_18 iter_args(%arg11 = %29, %arg12 = %27) -> (vector<16x1xf32>, vector<16x1xf32>)  : i32 {
        %61 = arith.addf %arg11, %arg12 : vector<16x1xf32>
        %cst_27 = arith.constant 5.000000e-01 : f32
        %62 = vector.broadcast %cst_27 : f32 to vector<16x1xf32>
        %63 = arith.mulf %62, %61 : vector<16x1xf32>
        %64 = vector.broadcast %63 : vector<16x1xf32> to vector<16x32xf32>
        %65 = arith.subf %25, %64 : vector<16x32xf32>
        %cst_28 = arith.constant 0.000000e+00 : f32
        %66 = vector.broadcast %cst_28 : f32 to vector<16x32xf32>
        %67 = arith.maximumf %65, %66 : vector<16x32xf32>
        %cst_29 = arith.constant dense<0.000000e+00> : vector<16xf32>
        %68 = vector.multi_reduction <add>, %67, %cst_29 [1] : vector<16x32xf32> to vector<16xf32>
        %69 = vector.shape_cast %68 : vector<16xf32> to vector<16x1xf32>
        %cst_30 = arith.constant 1.000000e+00 : f32
        %70 = vector.broadcast %cst_30 : f32 to vector<16x1xf32>
        %71 = arith.cmpf oge, %69, %70 : vector<16x1xf32>
        %72 = arith.select %71, %63, %arg11 : vector<16x1xi1>, vector<16x1xf32>
        %73 = arith.select %71, %arg12, %63 : vector<16x1xi1>, vector<16x1xf32>
        scf.yield %72, %73 : vector<16x1xf32>, vector<16x1xf32>
      }
      %32 = arith.addf %31#0, %31#1 : vector<16x1xf32>
      %cst_19 = arith.constant 5.000000e-01 : f32
      %33 = vector.broadcast %cst_19 : f32 to vector<16x1xf32>
      %34 = arith.mulf %33, %32 : vector<16x1xf32>
      %35 = vector.broadcast %34 : vector<16x1xf32> to vector<16x32xf32>
      %36 = arith.cmpf ogt, %25, %35 : vector<16x32xf32>
      %37 = arith.extui %36 : vector<16x32xi1> to vector<16x32xi32>
      %38 = arith.sitofp %37 : vector<16x32xi32> to vector<16x32xf32>
      %cst_20 = arith.constant dense<0.000000e+00> : vector<16xf32>
      %39 = vector.multi_reduction <add>, %38, %cst_20 [1] : vector<16x32xf32> to vector<16xf32>
      %40 = vector.shape_cast %39 : vector<16xf32> to vector<16x1xf32>
      %cst_21 = arith.constant 1.000000e+00 : f32
      %41 = vector.broadcast %cst_21 : f32 to vector<16x1xf32>
      %42 = arith.maximumf %40, %41 : vector<16x1xf32>
      %cst_22 = arith.constant 0.000000e+00 : f32
      %43 = vector.broadcast %cst_22 : f32 to vector<16x32xf32>
      %44 = arith.select %36, %25, %43 : vector<16x32xi1>, vector<16x32xf32>
      %cst_23 = arith.constant dense<0.000000e+00> : vector<16xf32>
      %45 = vector.multi_reduction <add>, %44, %cst_23 [1] : vector<16x32xf32> to vector<16xf32>
      %46 = vector.shape_cast %45 : vector<16xf32> to vector<16x1xf32>
      %cst_24 = arith.constant 1.000000e+00 : f32
      %47 = vector.broadcast %cst_24 : f32 to vector<16x1xf32>
      %48 = arith.subf %46, %47 : vector<16x1xf32>
      %49 = arith.divf %48, %42 : vector<16x1xf32>
      %50 = vector.broadcast %49 : vector<16x1xf32> to vector<16x32xf32>
      %51 = arith.subf %25, %50 : vector<16x32xf32>
      %cst_25 = arith.constant 0.000000e+00 : f32
      %52 = vector.broadcast %cst_25 : f32 to vector<16x32xf32>
      %53 = arith.maximumf %51, %52 : vector<16x32xf32>
      %54 = arith.sitofp %arg7 : i32 to f32
      %cst_26 = arith.constant 3.000000e+00 : f32
      %55 = arith.addf %54, %cst_26 : f32
      %56 = arith.divf %54, %55 : f32
      %57 = arith.subf %53, %arg9 : vector<16x32xf32>
      %58 = vector.broadcast %56 : f32 to vector<16x32xf32>
      %59 = arith.mulf %58, %57 : vector<16x32xf32>
      %60 = arith.addf %53, %59 : vector<16x32xf32>
      scf.yield %60, %53 : vector<16x32xf32>, vector<16x32xf32>
    }
    %c5_i32_10 = arith.constant 5 : i32
    %cst_11 = arith.constant dense<0.000000e+00> : vector<16x16xf32>
    %21 = tpu.matmul %20#1, %1, %cst_11 {dimension_numbers = #tpu.dot_dimension_numbers<[1], [0], [0], [1], [0, 0, 1, 1], [], []>} : vector<16x32xf32>, vector<32x16xf32>, vector<16x16xf32> -> vector<16x16xf32>
    %c0_12 = arith.constant 0 : index
    %c0_13 = arith.constant 0 : index
    %22 = vector.load %arg6[%c0_12, %c0_13] : memref<16x16xf32, #tpu.memory_space<vmem>>, vector<16x16xf32>
    tpu.vector_store %arg6[%c0_12, %c0_13], %21 {strides = array<i32>} : memref<16x16xf32, #tpu.memory_space<vmem>>, vector<16x16xf32>,
    return
  }
  func.func @transform_0(%arg0: i32, %arg1: memref<2xf32, #tpu.memory_space<smem>>) -> (i32, i32) {
    %c0_i32 = arith.constant 0 : i32
    %c0_i32_0 = arith.constant 0 : i32
    return %arg0, %c0_i32 : i32, i32
  }
  func.func @transform_1(%arg0: i32, %arg1: memref<2xf32, #tpu.memory_space<smem>>) -> (i32, i32) {
    %c0_i32 = arith.constant 0 : i32
    %c0_i32_0 = arith.constant 0 : i32
    %c0_i32_1 = arith.constant 0 : i32
    return %c0_i32, %c0_i32_0 : i32, i32
  }
  func.func @transform_2(%arg0: i32, %arg1: memref<2xf32, #tpu.memory_space<smem>>) -> (i32, i32) {
    %c0_i32 = arith.constant 0 : i32
    %c0_i32_0 = arith.constant 0 : i32
    %c0_i32_1 = arith.constant 0 : i32
    return %c0_i32, %c0_i32_0 : i32, i32
  }
  func.func @transform_3(%arg0: i32, %arg1: memref<2xf32, #tpu.memory_space<smem>>) -> (i32, i32) {
    %c0_i32 = arith.constant 0 : i32
    %c0_i32_0 = arith.constant 0 : i32
    %c0_i32_1 = arith.constant 0 : i32
    return %c0_i32, %c0_i32_0 : i32, i32
  }
  func.func @transform_4(%arg0: i32, %arg1: memref<2xf32, #tpu.memory_space<smem>>) -> (i32, i32) {
    %c0_i32 = arith.constant 0 : i32
    %c0_i32_0 = arith.constant 0 : i32
    return %arg0, %c0_i32 : i32, i32
  }
}

</mosaic_0001>

<llo_original>
// kernel: tpu_custom_call.1
$region0: #{tpu_custom_call.1}
  #allocation0 [shape = 'u32[]', space=smem, size = 0x4, offset = 0x4, fixed_abs, tag = 'smem constant byte address 0x4 - core index']
  #allocation1 [shape = 'u32[72,128]{1,0:T(1,128)}', space=vmem, size = 0x9000, scoped, tag = 'internal scratch']
  #allocation2 [shape = 's32[1]{0}', space=sflag, size = 0x4, scoped, tag = 'scoped memory for tpu_custom_call.1']
  #allocation3 [shape = 'u8[512]{0}', space=smem, size = 0x200, scoped, tag = 'prefetched SMEM operand 0']
  %s0 = inlined_call_operand.vmem [shape: f32[2], index: 0, kind: input, shape index: {}]
  %s1 = inlined_call_operand.vmem [shape: f32[16,16], index: 1, kind: input, shape index: {}]
  %s2 = inlined_call_operand.vmem [shape: f32[32,16], index: 2, kind: input, shape index: {}]
  %s3 = inlined_call_operand.vmem [shape: f32[32,32], index: 3, kind: input, shape index: {}]
  %s4 = inlined_call_operand.vmem [shape: f32[1,32], index: 4, kind: input, shape index: {}]
  %s5 = inlined_call_operand.hbm [shape: f32[16,16], index: 5, kind: output, shape index: {}]
  %s6 = sld [smem:[#allocation0]]
  $region40: #{tpu_custom_call.1} parent=0
    _
  %s8 = ssub.s32 1, %s6
  %s9 = scalar_select 0, %s8, %s6
  %s11 = sshll.u32 %s0, 4
  %s12 = int_to_ptr.vmem [resolvable:$true] %s11
  %14 = dma.vmem_to_smem %s12, 16, [#allocation3], [#allocation2]
  %16 = dma.done [#allocation2], 16
  %17 = sfence
  $region1: #{tpu_custom_call.1} parent=0
    #allocation4 [shape = 'u8[8192]{0}', space=vmem, size = 0x2000, scoped, tag = 'output window, operand 0, single buffered']
    #allocation5 [shape = 's32[1]{0}', space=sflag, size = 0x4, scoped, tag = 'scoped memory for tpu_custom_call.1']
    %18 = vsyncpa [#allocation5], 0
    // Predicated region
    $region2: #{tpu_custom_call.1} parent=1 // pred_check
      _
    $region3: #{tpu_custom_call.1} parent=1 // pred_check_branch
      %20 = sbr.rel (0) target = $region5
    $region4: #{tpu_custom_call.1} parent=1 // pred_region
      _
    $region5: #{tpu_custom_call.1} parent=1 // pred_fallthru
      _
    // Predicated region
    $region6: #{tpu_custom_call.1} parent=1 // pred_check
      _
    $region7: #{tpu_custom_call.1} parent=1 // pred_check_branch
      %22 = sbr.rel (0) target = $region9
    $region8: #{tpu_custom_call.1} parent=1 // pred_region
      _
    $region9: #{tpu_custom_call.1} parent=1 // pred_fallthru
      _
    // Predicated region
    $region10: #{tpu_custom_call.1} parent=1 // pred_check
      _
    $region11: #{tpu_custom_call.1} parent=1 // pred_check_branch
      %24 = sbr.rel (0) target = $region13
    $region12: #{tpu_custom_call.1} parent=1 // pred_region
      _
    $region13: #{tpu_custom_call.1} parent=1 // pred_fallthru
      _
    // Predicated region
    $region14: #{tpu_custom_call.1} parent=1 // pred_check
      _
    $region15: #{tpu_custom_call.1} parent=1 // pred_check_branch
      %26 = sbr.rel (0) target = $region17
    $region16: #{tpu_custom_call.1} parent=1 // pred_region
      _
    $region17: #{tpu_custom_call.1} parent=1 // pred_fallthru
      _
    %v27 = vld [vmem:[%s1] sm:$0xff]
    %v28 = vld [vmem:[%s1 + $0x8] sm:$0xff]
    %v29 = vld [vmem:[%s2] sm:$0xff]
    %v30 = vld [vmem:[%s2 + $0x8] sm:$0xff]
    %v31 = vld [vmem:[%s2 + $0x10] sm:$0xff]
    %v32 = vld [vmem:[%s2 + $0x18] sm:$0xff]
    %v33 = vld [vmem:[%s3] sm:$0xff]
    %v34 = vld [vmem:[%s3 + $0x8] sm:$0xff]
    %v35 = vld [vmem:[%s3 + $0x10] sm:$0xff]
    %v36 = vld [vmem:[%s3 + $0x18] sm:$0xff]
    %v37 = vld [vmem:[%s4] sm:$0x1]
    %s38 = sld [smem:[#allocation3]]
    %s39 = sld [smem:[#allocation3 + $0x1]]
    %vm40 = vcmask 130048
    %v42 = vsel %vm40, %v27, 0
    %v45 = vsel %vm40, %v28, 0
    %v48 = vsel %vm40, %v29, 0
    %v51 = vsel %vm40, %v30, 0
    %v54 = vsel %vm40, %v31, 0
    %v57 = vsel %vm40, %v32, 0
    %59 = vmatpush.xpose.msra.mxu0 0.0
    %60 = vmatpush.xpose.msra.mxu0 0.0
    %61 = vmatpush.xpose.msra.mxu0 0.0
    %62 = vmatpush.xpose.msra.mxu0 0.0
    %63 = vmatpush.xpose.msra.mxu0 0.0
    %64 = vmatpush.xpose.msra.mxu0 0.0
    %65 = vmatpush.xpose.msra.mxu0 0.0
    %66 = vmatpush.xpose.msra.mxu0 0.0
    %67 = vmatpush.xpose.msra.mxu0 0.0
    %68 = vmatpush.xpose.msra.mxu0 0.0
    %69 = vmatpush.xpose.msra.mxu0 0.0
    %70 = vmatpush.xpose.msra.mxu0 0.0
    %71 = vmatpush.xpose.msra.mxu0 %v57
    %72 = vmatpush.xpose.msra.mxu0 %v54
    %73 = vmatpush.xpose.msra.mxu0 %v51
    %74 = vmatpush.xpose.msra.mxu0 %v48
    %75 = vmatmul.f32.gmra.mxu0 %v42
    %v76 = vpop.f32.mrf.mxu0
    %v77 = vadd.f32 0.0, %v76
    %78 = vmatmul.f32.gmra.mxu0 %v45
    %v79 = vpop.f32.mrf.mxu0
    %v80 = vadd.f32 0.0, %v79
    %81 = vdwg.mxu0
    %v82 = vmul.f32 %v27, %v27
    %v83 = vmul.f32 %v28, %v28
    %v84 = vsel %vm40, %v82, 0.0
    %85 = vadd.xlane.f32.xlu0 %v84
    %v86 = vpop.xlane.xlu0 %85
    %v87 = vsel %vm40, %v83, 0.0
    %88 = vadd.xlane.f32.xlu0 %v87
    %v89 = vpop.xlane.xlu0 %88
    %v90 = vstv %s38
    %v91 = vmul.f32 %v90, %v77
    %v92 = vmul.f32 %v90, %v80
    %v93 = vstv %s39
    %v94 = vmul.f32 %v93, %v86
    %v95 = vmul.f32 %v93, %v89
    %v96 = vsub.f32 %v91, %v94
    %v97 = vsub.f32 %v92, %v95
    %v99 = vperm.slane %v37, 0
    %v101 = vadd.f32 %v96, %v99
    %v102 = vadd.f32 %v97, %v99
    loop: start=0, step=1, limit=5
    $region18: #{tpu_custom_call.1} parent=1 // loop_pre_header
      _
    $region19: #{tpu_custom_call.1} parent=1 // loop_header
      %s104 = sphi 0, %s108
      %p105 = scmp.ge.s32.totalorder %s104, 5
      %v109 = vphi 0.0, %v271
      %v110 = vphi 0.0, %v272
      %v111 = vphi 0.0, %v245
      %v112 = vphi 0.0, %v246
    $region20: #{tpu_custom_call.1} parent=1 // loop_header_branch
      %107 = sbr.rel (%p105) target = $region24
    $region21: #{tpu_custom_call.1} parent=1 // loop_body
      %vm113 = vcmask 261120
      %v115 = vsel %vm113, %v109, 0
      %v118 = vsel %vm113, %v110, 0
      %120 = vmatpush.msra.mxu0 0.0
      %121 = vmatpush.msra.mxu0 0.0
      %122 = vmatpush.msra.mxu0 0.0
      %123 = vmatpush.msra.mxu0 0.0
      %124 = vmatpush.msra.mxu0 0.0
      %125 = vmatpush.msra.mxu0 0.0
      %126 = vmatpush.msra.mxu0 0.0
      %127 = vmatpush.msra.mxu0 0.0
      %128 = vmatpush.msra.mxu0 0.0
      %129 = vmatpush.msra.mxu0 0.0
      %130 = vmatpush.msra.mxu0 0.0
      %131 = vmatpush.msra.mxu0 0.0
      %132 = vmatpush.msra.mxu0 %v36
      %133 = vmatpush.msra.mxu0 %v35
      %134 = vmatpush.msra.mxu0 %v34
      %135 = vmatpush.msra.mxu0 %v33
      %136 = vmatmul.f32.gmra.mxu0 %v115
      %v137 = vpop.f32.mrf.mxu0
      %v138 = vadd.f32 0.0, %v137
      %139 = vmatmul.f32.gmra.mxu0 %v118
      %v140 = vpop.f32.mrf.mxu0
      %v141 = vadd.f32 0.0, %v140
      %142 = vdwg.mxu0
      %v143 = vadd.f32 %v109, %v138
      %v144 = vadd.f32 %v110, %v141
      %v145 = vadd.f32 %v143, %v101
      %v146 = vadd.f32 %v144, %v102
      %v147 = vsel %vm113, %v145, -inf
      %148 = vmax.xlane.f32.xlu0 %v147
      %v149 = vpop.xlane.xlu0 %148
      %v150 = vsel %vm113, %v146, -inf
      %151 = vmax.xlane.f32.xlu0 %v150
      %v152 = vpop.xlane.xlu0 %151
      %v153 = vsub.f32 %v149, 1.0
      %v154 = vsub.f32 %v152, 1.0
      loop: start=0, step=1, limit=26
      $region25: #{tpu_custom_call.1} parent=21 // loop_pre_header
        _
      $region26: #{tpu_custom_call.1} parent=21 // loop_header
        %s156 = sphi 0, %s160
        %p157 = scmp.ge.s32.totalorder %s156, 26
        %v161 = vphi %v153, %v181
        %v162 = vphi %v154, %v182
        %v163 = vphi %v149, %v183
        %v164 = vphi %v152, %v184
      $region27: #{tpu_custom_call.1} parent=21 // loop_header_branch
        %159 = sbr.rel (%p157) target = $region31
      $region28: #{tpu_custom_call.1} parent=21 // loop_body
        %v165 = vadd.f32 %v161, %v163
        %v166 = vadd.f32 %v162, %v164
        %v167 = vmul.f32 %v165, 0.5
        %v168 = vmul.f32 %v166, 0.5
        %v169 = vsub.f32 %v145, %v167
        %v170 = vsub.f32 %v146, %v168
        %v171 = vmax.f32 %v169, 0.0
        %v172 = vmax.f32 %v170, 0.0
        %v173 = vsel %vm113, %v171, 0.0
        %174 = vadd.xlane.f32.xlu0 %v173
        %v175 = vpop.xlane.xlu0 %174
        %v176 = vsel %vm113, %v172, 0.0
        %177 = vadd.xlane.f32.xlu0 %v176
        %v178 = vpop.xlane.xlu0 %177
        %vm179 = vcmp.ge.f32.partialorder %v175, 1.0
        %vm180 = vcmp.ge.f32.partialorder %v178, 1.0
        %v181 = vsel %vm179, %v167, %v161
        %v182 = vsel %vm180, %v168, %v162
        %v183 = vsel %vm179, %v163, %v167
        %v184 = vsel %vm180, %v164, %v168
      $region29: #{tpu_custom_call.1} parent=21 // loop_footer
        %s160 = sadd.s32 1, %s156
      $region30: #{tpu_custom_call.1} parent=21 // loop_footer_branch
        %155 = sbr.rel target = $region26
      $region31: #{tpu_custom_call.1} parent=21 // loop_exit
        _
      %v185 = vadd.f32 %v161, %v163
      %v186 = vadd.f32 %v162, %v164
      %v187 = vmul.f32 %v185, 0.5
      %v188 = vmul.f32 %v186, 0.5
      %vm189 = vcmp.gt.f32.partialorder %v145, %v187
      %vm190 = vcmp.gt.f32.partialorder %v146, %v188
      %v191 = vsel %vm189, 1, 0
      %v192 = vsel %vm190, 1, 0
      %v193 = vcvt.s32.f32 %v191
      %v194 = vcvt.s32.f32 %v192
      %v195 = vsel %vm113, %v193, 0.0
      %196 = vadd.xlane.f32.xlu0 %v195
      %v197 = vpop.xlane.xlu0 %196
      %v198 = vsel %vm113, %v194, 0.0
      %199 = vadd.xlane.f32.xlu0 %v198
      %v200 = vpop.xlane.xlu0 %199
      %v201 = vmax.f32 %v197, 1.0
      %v202 = vmax.f32 %v200, 1.0
      %v203 = vsel %vm189, %v145, 0.0
      %v204 = vsel %vm190, %v146, 0.0
      %v205 = vsel %vm113, %v203, 0.0
      %206 = vadd.xlane.f32.xlu0 %v205
      %v207 = vpop.xlane.xlu0 %206
      %v208 = vsel %vm113, %v204, 0.0
      %209 = vadd.xlane.f32.xlu0 %v208
      %v210 = vpop.xlane.xlu0 %209
      %v211 = vsub.f32 %v207, 1.0
      %v212 = vsub.f32 %v210, 1.0
      %v213 = vrcp.pop %v201
      %v214 = vmul.f32 %v201, %v213
      %v215 = vsub.f32 1.0, %v214
      %v216 = vmul.f32 %v213, %v215
      %v217 = vadd.f32 %v213, %v216
      %vm218 = vweird.f32 %v201
      %vm219 = vweird.f32 %v213
      %vm220 = vmor %vm218, %vm219
      %v221 = vsel %vm220, %v213, %v217
      %v222 = vand.u32 2147483647, %v201
      %vm223 = vcmp.eq.f32.partialorder %v222, 8.507059e+37
      %v224 = vand.u32 %v201, 2147483648
      %v225 = vor.u32 1.1754944e-38, %v224
      %v226 = vsel %vm223, %v225, %v221
      %v227 = vmul.f32 %v211, %v226
      %v228 = vrcp.pop %v202
      %v229 = vmul.f32 %v202, %v228
      %v230 = vsub.f32 1.0, %v229
      %v231 = vmul.f32 %v228, %v230
      %v232 = vadd.f32 %v228, %v231
      %vm233 = vweird.f32 %v202
      %vm234 = vweird.f32 %v228
      %vm235 = vmor %vm233, %vm234
      %v236 = vsel %vm235, %v228, %v232
      %v237 = vand.u32 2147483647, %v202
      %vm238 = vcmp.eq.f32.partialorder %v237, 8.507059e+37
      %v239 = vand.u32 %v202, 2147483648
      %v240 = vor.u32 1.1754944e-38, %v239
      %v241 = vsel %vm238, %v240, %v236
      %v242 = vmul.f32 %v212, %v241
      %v243 = vsub.f32 %v145, %v227
      %v244 = vsub.f32 %v146, %v242
      %v245 = vmax.f32 %v243, 0.0
      %v246 = vmax.f32 %v244, 0.0
      %s247 = scvt.s32.f32 %s104
      %s248 = sadd.f32 %s247, 3.0
      %v249 = vstv %s248
      %v250 = vrcp.pop %v249
      %v251 = vmul.f32 %v249, %v250
      %v252 = vsub.f32 1.0, %v251
      %v253 = vmul.f32 %v250, %v252
      %v254 = vadd.f32 %v250, %v253
      %vm255 = vweird.f32 %v249
      %vm256 = vweird.f32 %v250
      %vm257 = vmor %vm255, %vm256
      %v258 = vsel %vm257, %v250, %v254
      %v259 = vand.u32 2147483647, %v249
      %vm260 = vcmp.eq.f32.partialorder %v259, 8.507059e+37
      %v261 = vand.u32 %v249, 2147483648
      %v262 = vor.u32 1.1754944e-38, %v261
      %v263 = vsel %vm260, %v262, %v258
      %s264 = vtos %v263
      %s265 = smul.f32 %s247, %s264
      %v266 = vsub.f32 %v245, %v111
      %v267 = vsub.f32 %v246, %v112
      %v268 = vstv %s265
      %v269 = vmul.f32 %v268, %v266
      %v270 = vmul.f32 %v268, %v267
      %v271 = vadd.f32 %v245, %v269
      %v272 = vadd.f32 %v246, %v270
    $region22: #{tpu_custom_call.1} parent=1 // loop_footer
      %s108 = sadd.s32 1, %s104
    $region23: #{tpu_custom_call.1} parent=1 // loop_footer_branch
      %103 = sbr.rel target = $region19
    $region24: #{tpu_custom_call.1} parent=1 // loop_exit
      _
    %vm273 = vcmask 261120
    %v275 = vsel %vm273, %v111, 0
    %v278 = vsel %vm273, %v112, 0
    %280 = vmatpush.msra.mxu0 0.0
    %281 = vmatpush.msra.mxu0 0.0
    %282 = vmatpush.msra.mxu0 0.0
    %283 = vmatpush.msra.mxu0 0.0
    %284 = vmatpush.msra.mxu0 0.0
    %285 = vmatpush.msra.mxu0 0.0
    %286 = vmatpush.msra.mxu0 0.0
    %287 = vmatpush.msra.mxu0 0.0
    %288 = vmatpush.msra.mxu0 0.0
    %289 = vmatpush.msra.mxu0 0.0
    %290 = vmatpush.msra.mxu0 0.0
    %291 = vmatpush.msra.mxu0 0.0
    %292 = vmatpush.msra.mxu0 %v32
    %293 = vmatpush.msra.mxu0 %v31
    %294 = vmatpush.msra.mxu0 %v30
    %295 = vmatpush.msra.mxu0 %v29
    %296 = vmatmul.f32.gmra.mxu0 %v275
    %v297 = vpop.f32.mrf.mxu0
    %v298 = vadd.f32 0.0, %v297
    %299 = vmatmul.f32.gmra.mxu0 %v278
    %v300 = vpop.f32.mrf.mxu0
    %v301 = vadd.f32 0.0, %v300
    %302 = vdwg.mxu0
    %303 = vst.msk [vmem:[#allocation4] sm:$0xff] %vm40, %v298
    %304 = vst.msk [vmem:[#allocation4 + $0x8] sm:$0xff] %vm40, %v301
    // Predicated region
    $region32: #{tpu_custom_call.1} parent=1 // pred_check
      _
    $region33: #{tpu_custom_call.1} parent=1 // pred_check_branch
      %306 = sbr.rel (0) target = $region35
    $region34: #{tpu_custom_call.1} parent=1 // pred_region
      %308 = vsyncadd [#allocation5], 0
      %s309 = sshll.u32 [#allocation4], 4
      %s310 = int_to_ptr.vmem [resolvable:$true] %s309
      %s311 = sshll.u32 %s5, 4
      %s312 = int_to_ptr.hbm [resolvable:$true] %s311
      %317 = dma.vmem_to_hbm [thread:$0]  %s310, 256, %s312, [#allocation5], 128, 128, 8
    $region35: #{tpu_custom_call.1} parent=1 // pred_fallthru
      _
    // Predicated region
    $region36: #{tpu_custom_call.1} parent=1 // pred_check
      _
    $region37: #{tpu_custom_call.1} parent=1 // pred_check_branch
      %319 = sbr.rel (0) target = $region39
    $region38: #{tpu_custom_call.1} parent=1 // pred_region
      %321 = dma.done [#allocation5], 256
    $region39: #{tpu_custom_call.1} parent=1 // pred_fallthru
      _
    %322 = vsyncpa [#allocation5], 1

</llo_original>
